<compile_context>
chip_gen: v6e
topology: v6e:2x2x1
jax: 0.10.0
libtpu: 0.0.40
codegen_flags: <defaults>
</compile_context>

<pallas_src>
import functools

import jax
import jax.numpy as jnp
from jax.experimental import pallas as pl
from jax.experimental.pallas import tpu as pltpu


def _round_up(x, m):
    return (x + m - 1) // m * m


def ner_head_kernel(h_ref, w_ref, b_ref, lab_ref, logits_ref, part_ref, *,
                    num_class):
    """One (TN, H) tile: classifier matmul + bias, log-softmax NLL partials."""
    # Cast-in-kernel MXU feed: h arrives in its producer dtype (f32 here);
    # no wrapper-side padded/cast copy is ever materialized in HBM.
    h = h_ref[...].astype(jnp.bfloat16)               # (TN, H)   bf16
    w = w_ref[...]                                    # (H, Cp)   bf16 (resident)
    b = b_ref[...]                                    # (1, Cp)   f32  (resident)

    # nn.Linear classifier: MXU matmul (bf16 operands, f32 accumulate) + bias.
    logits = jnp.dot(h, w, preferred_element_type=jnp.float32) + b   # (TN, Cp) f32
    logits_ref[...] = logits.astype(jnp.bfloat16)     # lane-dense bf16 writeback

    # nn.CrossEntropyLoss(ignore_index=-1): per-tile partial sums.
    labels = lab_ref[...]                             # (TN, 1) int32
    col = jax.lax.broadcasted_iota(jnp.int32, logits.shape, 1)
    # Padded class columns must not enter the softmax normalization.
    masked = jnp.where(col < num_class, logits, jnp.float32(-1e30))
    m = jnp.max(masked, axis=-1, keepdims=True)
    lse = jnp.log(jnp.sum(jnp.exp(masked - m), axis=-1, keepdims=True))

    # logits[label] via one-hot sum; labels are in [0, C) for valid rows, so
    # padded columns and ignore_index (-1) / padded tail rows never match.
    onehot = (col == labels).astype(jnp.float32)
    picked = jnp.sum(masked * onehot, axis=-1, keepdims=True)         # (TN, 1)
    nll = (m + lse) - picked                                          # (TN, 1)

    valid = labels != -1                                              # (TN, 1) bool
    # jnp.where (not multiply) so NaN/inf from unspecified tail rows is dropped.
    sum_nll = jnp.sum(jnp.where(valid, nll, 0.0))
    sum_valid = jnp.sum(valid.astype(jnp.float32))

    out_col = jax.lax.broadcasted_iota(jnp.int32, part_ref.shape, 1)  # (1, 128)
    part_ref[...] = jnp.where(out_col == 0, sum_nll,
                              jnp.where(out_col == 1, sum_valid, 0.0))


def ner_forward(h, w_t, b, labels, *, num_class, tile_n=1024):
    """h: (N, H) f32 or bf16; w_t: (H, C); b: (C,); labels: (N,) int.

    Returns (loss, logits[(N, C) bf16]) matching
    CrossEntropyLoss(ignore_index=-1)(Linear(h), labels) up to bf16 rounding
    of the matmul operands / stored logits.
    """
    N, H = h.shape
    C = num_class
    C_pad = _round_up(C, 128)                  # lane-dense class dim
    TN = min(tile_n, _round_up(N, 16))         # row tile (bf16-out sublane pack = 16)
    num_tiles = pl.cdiv(N, TN)                 # >=2 tiles shard across v7x TCs
    N_pad = num_tiles * TN

    # Only the tiny per-token metadata / weights get padded copies; h does not.
    lab_p = jnp.full((N_pad, 1), -1, jnp.int32).at[:N, 0].set(labels.astype(jnp.int32))
    w_p = jnp.zeros((H, C_pad), jnp.bfloat16).at[:, :C].set(w_t.astype(jnp.bfloat16))
    b_p = jnp.zeros((1, C_pad), jnp.float32).at[0, :C].set(b.astype(jnp.float32))

    kernel = functools.partial(ner_head_kernel, num_class=C)
    logits_p, partials = pl.pallas_call(
        kernel,
        grid=(num_tiles,),
        out_shape=(jax.ShapeDtypeStruct((N_pad, C_pad), jnp.bfloat16),
                   jax.ShapeDtypeStruct((num_tiles, 128), jnp.float32)),
        in_specs=[pl.BlockSpec((TN, H), lambda i: (i, 0)),        # h stream (pipelined)
                  pl.BlockSpec((H, C_pad), lambda i: (0, 0)),     # W, stays resident
                  pl.BlockSpec((1, C_pad), lambda i: (0, 0)),     # bias, stays resident
                  pl.BlockSpec((TN, 1), lambda i: (i, 0))],       # labels (tiny)
        out_specs=(pl.BlockSpec((TN, C_pad), lambda i: (i, 0)),   # bf16 logits
                   pl.BlockSpec((1, 128), lambda i: (i, 0))),     # loss partials
        compiler_params=pltpu.CompilerParams(
            dimension_semantics=("parallel",),       # shards tiles across TCs on v7x
            vmem_limit_bytes=32 * 1024 * 1024),      # safe on v5e/v6e/v7x at TN<=1024
    )(h, w_p, b_p, lab_p)

    totals = jnp.sum(partials, axis=0)
    sum_nll, sum_valid = totals[0], totals[1]
    # Single global divide; guard the all-ignored case (PyTorch would give NaN).
    loss = sum_nll / jnp.maximum(sum_valid, 1.0)
    return loss, logits_p[:N, :C]


if __name__ == "__main__":
    key = jax.random.PRNGKey(0)
    B, L, H, C, V = 2, 8, 32, 8, 50   # batch, seq, hidden, num_class, vocab
    k1, k2, k3, k4, k5 = jax.random.split(key, 5)

    input_ids = jax.random.randint(k1, (B, L), 0, V)
    attention_mask = jnp.ones((B, L), jnp.int32)
    labels = jax.random.randint(k2, (B, L), -1, C)   # -1 entries are ignored

    # TODO(synk): the pretrained AutoModel transformer backbone has no clean
    # in-script Pallas equivalent; it is stood in for by a deterministic
    # embedding lookup producing hidden states h of the same shape (B, L, H).
    embed = jax.random.normal(k3, (V, H), jnp.float32) * 0.02
    h = embed[input_ids] * attention_mask[..., None].astype(jnp.float32)
    # dropout: eval-mode identity (deterministic), matching model.eval()

    # classifier = nn.Linear(hidden_size, num_class)
    W = jax.random.normal(k4, (C, H), jnp.float32) * (1.0 / jnp.sqrt(H))
    bias = jax.random.normal(k5, (C,), jnp.float32) * 0.01

    h_flat = h.reshape(B * L, H)                     # fed directly, no pad/cast copy
    lab_flat = labels.reshape(-1).astype(jnp.int32)
    loss, logits = ner_forward(h_flat, W.T, bias, lab_flat, num_class=C)
    jax.block_until_ready((loss, logits))

    # Plain-JAX reference (matmul operands rounded to bf16 like the kernel's
    # MXU feed; accumulation stays f32; kernel logits are stored in bf16).
    h_bf = h_flat.astype(jnp.bfloat16).astype(jnp.float32)
    w_bf = W.T.astype(jnp.bfloat16).astype(jnp.float32)
    logits_ref = h_bf @ w_bf + bias
    logp_ref = jax.nn.log_softmax(logits_ref, axis=-1)
    valid = lab_flat != -1
    safe_lab = jnp.where(valid, lab_flat, 0)
    nll_ref = -jnp.take_along_axis(logp_ref, safe_lab[:, None], axis=-1)[:, 0]
    loss_ref = jnp.sum(jnp.where(valid, nll_ref, 0.0)) / jnp.maximum(jnp.sum(valid), 1)

    assert logits.shape == (B * L, C)
    assert jnp.allclose(logits.astype(jnp.float32), logits_ref,
                        atol=2e-2, rtol=2e-2), "logits mismatch"
    assert jnp.allclose(loss, loss_ref, atol=2e-3, rtol=1e-3), "loss mismatch"
    print("KERNEL_OK")
</pallas_src>

<mosaic_0001>
module attributes {stable_mosaic.version = 11 : i64} {
  func.func @ner_head_kernel(%arg0: i32, %arg1: memref<16x32xf32, #tpu.memory_space<vmem>>, %arg2: memref<32x128xbf16, #tpu.memory_space<vmem>>, %arg3: memref<1x128xf32, #tpu.memory_space<vmem>>, %arg4: memref<16x1xi32, #tpu.memory_space<vmem>>, %arg5: memref<16x128xbf16, #tpu.memory_space<vmem>>, %arg6: memref<1x128xf32, #tpu.memory_space<vmem>>) attributes {dimension_semantics = [#tpu.dimension_semantics<parallel>], iteration_bounds = array<i64: 1>, scalar_prefetch = 0 : i64, scratch_operands = 0 : i64, tpu.core_type = #tpu.core_type<tc>, window_params = [{transform_indices = @transform_0, window_bounds = array<i64: 16, 32>}, {pipeline_mode = #tpu.pipeline_mode<synchronous>, transform_indices = @transform_1, window_bounds = array<i64: 32, 128>}, {pipeline_mode = #tpu.pipeline_mode<synchronous>, transform_indices = @transform_2, window_bounds = array<i64: 1, 128>}, {transform_indices = @transform_3, window_bounds = array<i64: 16, 1>}, {transform_indices = @transform_4, window_bounds = array<i64: 16, 128>}, {transform_indices = @transform_5, window_bounds = array<i64: 1, 128>}]} {
    %c0 = arith.constant 0 : index
    %c0_0 = arith.constant 0 : index
    %0 = vector.load %arg1[%c0, %c0_0] : memref<16x32xf32, #tpu.memory_space<vmem>>, vector<16x32xf32>
    %1 = arith.truncf %0 : vector<16x32xf32> to vector<16x32xbf16>
    %c0_1 = arith.constant 0 : index
    %c0_2 = arith.constant 0 : index
    %2 = vector.load %arg2[%c0_1, %c0_2] : memref<32x128xbf16, #tpu.memory_space<vmem>>, vector<32x128xbf16>
    %c0_3 = arith.constant 0 : index
    %c0_4 = arith.constant 0 : index
    %3 = vector.load %arg3[%c0_3, %c0_4] : memref<1x128xf32, #tpu.memory_space<vmem>>, vector<1x128xf32>
    %cst = arith.constant dense<0.000000e+00> : vector<16x128xf32>
    %4 = tpu.matmul %1, %2, %cst {dimension_numbers = #tpu.dot_dimension_numbers<[1], [0], [0], [1], [0, 0, 1, 1], [], []>} : vector<16x32xbf16>, vector<32x128xbf16>, vector<16x128xf32> -> vector<16x128xf32>
    %5 = vector.broadcast %3 : vector<1x128xf32> to vector<16x128xf32>
    %6 = arith.addf %4, %5 : vector<16x128xf32>
    %7 = arith.truncf %6 : vector<16x128xf32> to vector<16x128xbf16>
    %c0_5 = arith.constant 0 : index
    %c0_6 = arith.constant 0 : index
    %8 = vector.load %arg5[%c0_5, %c0_6] : memref<16x128xbf16, #tpu.memory_space<vmem>>, vector<16x128xbf16>
    tpu.vector_store %arg5[%c0_5, %c0_6], %7 {strides = array<i32>} : memref<16x128xbf16, #tpu.memory_space<vmem>>, vector<16x128xbf16>,
    %c0_7 = arith.constant 0 : index
    %c0_8 = arith.constant 0 : index
    %9 = vector.load %arg4[%c0_7, %c0_8] : memref<16x1xi32, #tpu.memory_space<vmem>>, vector<16x1xi32>
    %10 = tpu.iota {dimensions = array<i32: 1>} : vector<16x128xi32>
    %c8_i32 = arith.constant 8 : i32
    %11 = vector.broadcast %c8_i32 : i32 to vector<16x128xi32>
    %12 = arith.cmpi slt, %10, %11 : vector<16x128xi32>
    %cst_9 = arith.constant -1.000000e+30 : f32
    %13 = vector.broadcast %cst_9 : f32 to vector<16x128xf32>
    %14 = arith.select %12, %6, %13 : vector<16x128xi1>, vector<16x128xf32>
    %cst_10 = arith.constant dense<0xFF800000> : vector<16xf32>
    %15 = vector.multi_reduction <maximumf>, %14, %cst_10 [1] : vector<16x128xf32> to vector<16xf32>
    %16 = vector.shape_cast %15 : vector<16xf32> to vector<16x1xf32>
    %17 = vector.broadcast %16 : vector<16x1xf32> to vector<16x128xf32>
    %18 = arith.subf %14, %17 : vector<16x128xf32>
    %19 = math.exp %18 : vector<16x128xf32>
    %cst_11 = arith.constant dense<0.000000e+00> : vector<16xf32>
    %20 = vector.multi_reduction <add>, %19, %cst_11 [1] : vector<16x128xf32> to vector<16xf32>
    %21 = vector.shape_cast %20 : vector<16xf32> to vector<16x1xf32>
    %22 = math.log %21 : vector<16x1xf32>
    %23 = vector.broadcast %9 : vector<16x1xi32> to vector<16x128xi32>
    %24 = arith.cmpi eq, %10, %23 : vector<16x128xi32>
    %25 = arith.extui %24 : vector<16x128xi1> to vector<16x128xi32>
    %26 = arith.sitofp %25 : vector<16x128xi32> to vector<16x128xf32>
    %27 = arith.mulf %14, %26 : vector<16x128xf32>
    %cst_12 = arith.constant dense<0.000000e+00> : vector<16xf32>
    %28 = vector.multi_reduction <add>, %27, %cst_12 [1] : vector<16x128xf32> to vector<16xf32>
    %29 = vector.shape_cast %28 : vector<16xf32> to vector<16x1xf32>
    %30 = arith.addf %16, %22 : vector<16x1xf32>
    %31 = arith.subf %30, %29 : vector<16x1xf32>
    %c-1_i32 = arith.constant -1 : i32
    %32 = vector.broadcast %c-1_i32 : i32 to vector<16x1xi32>
    %33 = arith.cmpi ne, %9, %32 : vector<16x1xi32>
    %cst_13 = arith.constant 0.000000e+00 : f32
    %34 = vector.broadcast %cst_13 : f32 to vector<16x1xf32>
    %35 = arith.select %33, %31, %34 : vector<16x1xi1>, vector<16x1xf32>
    %36 = vector.shape_cast %35 : vector<16x1xf32> to vector<1x16x1xf32>
    %cst_14 = arith.constant dense<0.000000e+00> : vector<1xf32>
    %37 = vector.multi_reduction <add>, %36, %cst_14 [1, 2] : vector<1x16x1xf32> to vector<1xf32>
    %38 = vector.shape_cast %37 : vector<1xf32> to vector<1x1x1xf32>
    %39 = vector.extract %38[0, 0, 0] : f32 from vector<1x1x1xf32>
    %40 = arith.extui %33 : vector<16x1xi1> to vector<16x1xi32>
    %41 = arith.sitofp %40 : vector<16x1xi32> to vector<16x1xf32>
    %42 = vector.shape_cast %41 : vector<16x1xf32> to vector<1x16x1xf32>
    %cst_15 = arith.constant dense<0.000000e+00> : vector<1xf32>
    %43 = vector.multi_reduction <add>, %42, %cst_15 [1, 2] : vector<1x16x1xf32> to vector<1xf32>
    %44 = vector.shape_cast %43 : vector<1xf32> to vector<1x1x1xf32>
    %45 = vector.extract %44[0, 0, 0] : f32 from vector<1x1x1xf32>
    %46 = tpu.iota {dimensions = array<i32: 1>} : vector<1x128xi32>
    %c0_i32 = arith.constant 0 : i32
    %47 = vector.broadcast %c0_i32 : i32 to vector<1x128xi32>
    %48 = arith.cmpi eq, %46, %47 : vector<1x128xi32>
    %c1_i32 = arith.constant 1 : i32
    %49 = vector.broadcast %c1_i32 : i32 to vector<1x128xi32>
    %50 = arith.cmpi eq, %46, %49 : vector<1x128xi32>
    %cst_16 = arith.constant 0.000000e+00 : f32
    %51 = vector.broadcast %45 : f32 to vector<1x128xf32>
    %52 = vector.broadcast %cst_16 : f32 to vector<1x128xf32>
    %53 = arith.select %50, %51, %52 : vector<1x128xi1>, vector<1x128xf32>
    %54 = vector.broadcast %39 : f32 to vector<1x128xf32>
    %55 = arith.select %48, %54, %53 : vector<1x128xi1>, vector<1x128xf32>
    %c0_17 = arith.constant 0 : index
    %c0_18 = arith.constant 0 : index
    %56 = vector.load %arg6[%c0_17, %c0_18] : memref<1x128xf32, #tpu.memory_space<vmem>>, vector<1x128xf32>
    tpu.vector_store %arg6[%c0_17, %c0_18], %55 {strides = array<i32>} : memref<1x128xf32, #tpu.memory_space<vmem>>, vector<1x128xf32>,
    return
  }
  func.func @transform_0(%arg0: i32) -> (i32, i32) {
    %c0_i32 = arith.constant 0 : i32
    %c0_i32_0 = arith.constant 0 : i32
    return %arg0, %c0_i32 : i32, i32
  }
  func.func @transform_1(%arg0: i32) -> (i32, i32) {
    %c0_i32 = arith.constant 0 : i32
    %c0_i32_0 = arith.constant 0 : i32
    %c0_i32_1 = arith.constant 0 : i32
    return %c0_i32, %c0_i32_0 : i32, i32
  }
  func.func @transform_2(%arg0: i32) -> (i32, i32) {
    %c0_i32 = arith.constant 0 : i32
    %c0_i32_0 = arith.constant 0 : i32
    %c0_i32_1 = arith.constant 0 : i32
    return %c0_i32, %c0_i32_0 : i32, i32
  }
  func.func @transform_3(%arg0: i32) -> (i32, i32) {
    %c0_i32 = arith.constant 0 : i32
    %c0_i32_0 = arith.constant 0 : i32
    return %arg0, %c0_i32 : i32, i32
  }
  func.func @transform_4(%arg0: i32) -> (i32, i32) {
    %c0_i32 = arith.constant 0 : i32
    %c0_i32_0 = arith.constant 0 : i32
    return %arg0, %c0_i32 : i32, i32
  }
  func.func @transform_5(%arg0: i32) -> (i32, i32) {
    %c0_i32 = arith.constant 0 : i32
    %c0_i32_0 = arith.constant 0 : i32
    return %arg0, %c0_i32 : i32, i32
  }
}

</mosaic_0001>

<llo_original>
// kernel: tpu_custom_call.1
$region0: #{tpu_custom_call.1}
  #allocation0 [shape = 'u32[]', space=smem, size = 0x4, offset = 0x4, fixed_abs, tag = 'smem constant byte address 0x4 - core index']
  #allocation1 [shape = 'u32[144,128]{1,0:T(1,128)}', space=vmem, size = 0x12000, scoped, tag = 'internal scratch']
  %s0 = inlined_call_operand.vmem [shape: f32[16,32], index: 0, kind: input, shape index: {}]
  %s1 = inlined_call_operand.hbm [shape: bf16[32,128], index: 1, kind: input, shape index: {}]
  %s2 = inlined_call_operand.vmem [shape: f32[1,128], index: 2, kind: input, shape index: {}]
  %s3 = inlined_call_operand.vmem [shape: s32[16,1], index: 3, kind: input, shape index: {}]
  %s4 = inlined_call_operand.hbm [shape: bf16[16,128], index: 4, kind: output, shape index: {0}]
  %s5 = inlined_call_operand.hbm [shape: f32[1,128], index: 5, kind: output, shape index: {1}]
  %6 = xla_tuple %s4, %s5
  %s7 = sld [smem:[#allocation0]]
  $region38: #{tpu_custom_call.1} parent=0
    _
  %s9 = ssub.s32 1, %s7
  %s10 = scalar_select 0, %s9, %s7
  $region1: #{tpu_custom_call.1} parent=0
    #allocation2 [shape = 'u8[8192]{0}', space=vmem, size = 0x2000, scoped, tag = 'input window, operand 1, single buffered']
    #allocation3 [shape = 's32[1]{0}', space=sflag, size = 0x4, scoped, tag = 'scoped memory for tpu_custom_call.1']
    #allocation4 [shape = 's32[1]{0}', space=sflag, size = 0x4, scoped, tag = 'scoped memory for tpu_custom_call.1']
    #allocation5 [shape = 'u8[4096]{0}', space=vmem, size = 0x1000, scoped, tag = 'output window, operand 0, single buffered']
    #allocation6 [shape = 'u8[512]{0}', space=vmem, size = 0x400, scoped, tag = 'output window, operand 1, single buffered']
    #allocation7 [shape = 's32[1]{0}', space=sflag, size = 0x4, scoped, tag = 'scoped memory for tpu_custom_call.1']
    %11 = vsyncpa [#allocation3], 0
    %12 = vsyncpa [#allocation4], 0
    %13 = vsyncpa [#allocation7], 0
    // Predicated region
    $region2: #{tpu_custom_call.1} parent=1 // pred_check
      _
    $region3: #{tpu_custom_call.1} parent=1 // pred_check_branch
      %15 = sbr.rel (0) target = $region5
    $region4: #{tpu_custom_call.1} parent=1 // pred_region
      _
    $region5: #{tpu_custom_call.1} parent=1 // pred_fallthru
      _
    // Predicated region
    $region6: #{tpu_custom_call.1} parent=1 // pred_check
      _
    $region7: #{tpu_custom_call.1} parent=1 // pred_check_branch
      %17 = sbr.rel (0) target = $region9
    $region8: #{tpu_custom_call.1} parent=1 // pred_region
      %s19 = ssub.s32 256, 256
      %20 = vsyncadd [#allocation3], %s19
      %s21 = sshll.u32 [#allocation2], 4
      %s22 = int_to_ptr.vmem [resolvable:$true] %s21
      %27 = dma.hbm_to_vmem [thread:$0]  %s1, 256, %s22, [#allocation3], 64, 64, 4
    $region9: #{tpu_custom_call.1} parent=1 // pred_fallthru
      _
    // Predicated region
    $region10: #{tpu_custom_call.1} parent=1 // pred_check
      _
    $region11: #{tpu_custom_call.1} parent=1 // pred_check_branch
      %29 = sbr.rel (0) target = $region13
    $region12: #{tpu_custom_call.1} parent=1 // pred_region
      _
    $region13: #{tpu_custom_call.1} parent=1 // pred_fallthru
      _
    // Predicated region
    $region14: #{tpu_custom_call.1} parent=1 // pred_check
      _
    $region15: #{tpu_custom_call.1} parent=1 // pred_check_branch
      %31 = sbr.rel (0) target = $region17
    $region16: #{tpu_custom_call.1} parent=1 // pred_region
      _
    $region17: #{tpu_custom_call.1} parent=1 // pred_fallthru
      _
    // Predicated region
    $region18: #{tpu_custom_call.1} parent=1 // pred_check
      _
    $region19: #{tpu_custom_call.1} parent=1 // pred_check_branch
      %33 = sbr.rel (0) target = $region21
    $region20: #{tpu_custom_call.1} parent=1 // pred_region
      %34 = dma.done [#allocation3], 256
    $region21: #{tpu_custom_call.1} parent=1 // pred_fallthru
      _
    %v36 = vld [vmem:[%s0] sm:$0xff]
    %v37 = vld [vmem:[%s0 + $0x8] sm:$0xff]
    %v38 = vpack.c.bf16 %v37, %v36
    %v39 = vld [vmem:[#allocation2] sm:$0xf]
    %v40 = vld [vmem:[#allocation2 + $0x4] sm:$0xf]
    %v41 = vld [vmem:[#allocation2 + $0x8] sm:$0xf]
    %v42 = vld [vmem:[#allocation2 + $0xc] sm:$0xf]
    %v43 = vld [vmem:[%s2] sm:$0x1]
    %v45 = vlaneseq
    %v46 = vshrl.u32 %v45, 7
    %v47 = vsub.s32 0, %v46
    %v48 = vrot.slane %v43, %v47
    %v54 = vunpack.c.l.b16 %v39
    %v55 = vunpack.c.l.b16 %v40
    %v56 = vunpack.c.l.b16 %v41
    %v57 = vunpack.c.l.b16 %v42
    %v58 = vpack.c.b16 %v55, %v54
    %v59 = vpack.c.b16 %v57, %v56
    %vm62 = vcmask 261120
    %v64 = vsel %vm62, %v38, 0
    %66 = vmatprep.subr.bf16.mxu0 0
    %67 = vmatpush1.bf16.msra.mxu0 0
    %68 = vmatprep.subr.bf16.mxu0 0
    %69 = vmatpush1.bf16.msra.mxu0 0
    %70 = vmatprep.subr.bf16.mxu0 0
    %71 = vmatpush1.bf16.msra.mxu0 0
    %72 = vmatprep.subr.bf16.mxu0 0
    %73 = vmatpush1.bf16.msra.mxu0 0
    %74 = vmatprep.subr.bf16.mxu0 0
    %75 = vmatpush1.bf16.msra.mxu0 0
    %76 = vmatprep.subr.bf16.mxu0 0
    %77 = vmatpush1.bf16.msra.mxu0 0
    %78 = vmatprep.subr.bf16.mxu0 0
    %79 = vmatpush1.bf16.msra.mxu0 %v59
    %80 = vmatprep.subr.bf16.mxu0 0
    %81 = vmatpush1.bf16.msra.mxu0 %v58
    %82 = vmatprep.subr.bf16.mxu0 0
    %83 = vmatpush2.bf16.msra.mxu0 0
    %84 = vmatprep.subr.bf16.mxu0 0
    %85 = vmatpush2.bf16.msra.mxu0 0
    %86 = vmatprep.subr.bf16.mxu0 0
    %87 = vmatpush2.bf16.msra.mxu0 0
    %88 = vmatprep.subr.bf16.mxu0 0
    %89 = vmatpush2.bf16.msra.mxu0 0
    %90 = vmatprep.subr.bf16.mxu0 0
    %91 = vmatpush2.bf16.msra.mxu0 0
    %92 = vmatprep.subr.bf16.mxu0 0
    %93 = vmatpush2.bf16.msra.mxu0 0
    %94 = vmatprep.subr.bf16.mxu0 0
    %95 = vmatpush2.bf16.msra.mxu0 0
    %96 = vmatprep.subr.bf16.mxu0 0
    %97 = vmatpush2.bf16.msra.mxu0 0
    %98 = vmatprep.mubr.bf16.mxu0 0
    %99 = vmatmul.mubr.bf16.gmra.mxu0 %v64
    %v100 = vpop.f32.mrf.mxu0
    %v101 = vadd.f32 %v48, %v100
    %v102 = vpop.f32.mrf.mxu0
    %v103 = vpop.f32.mrf.mxu0
    %v104 = vadd.f32 %v48, %v103
    %v105 = vpop.f32.mrf.mxu0
    %106 = vdwg.mxu0
    %v107 = vpack.c.bf16 %v104, %v101
    %v109 = vunpack.c.l.b16 %v107
    %v110 = vunpack.c.h.b16 %v107
    %v111 = vpack.c.b16 %v109, %v109
    %v112 = vpack.c.b16 %v110, %v110
    %115 = vst [vmem:[#allocation5] sm:$0xf] %v111
    %116 = vst [vmem:[#allocation5 + $0x4] sm:$0xf] %v112
    %v117 = vld [vmem:[%s3] sm:$0xff]
    %v118 = vld [vmem:[%s3 + $0x8] sm:$0xff]
    %v119 = vlaneseq
    %v120 = vand.u32 %v119, 127
    %vm121 = vcmp.lt.s32.totalorder %v120, 8
    %v122 = vsel %vm121, %v101, -1e+30
    %v123 = vsel %vm121, %v104, -1e+30
    %124 = vmax.xlane.f32.xlu0 %v122
    %v125 = vpop.xlane.xlu0 %124
    %126 = vmax.xlane.f32.xlu0 %v123
    %v127 = vpop.xlane.xlu0 %126
    %v128 = vsub.f32 %v122, %v125
    %v129 = vsub.f32 %v123, %v127
    %v130 = vmul.f32 %v128, 1.442695
    %v131 = vpow.pop %v130
    %v132 = vmul.f32 %v129, 1.442695
    %v133 = vpow.pop %v132
    %134 = vadd.xlane.f32.xlu0 %v131
    %v135 = vpop.xlane.xlu0 %134
    %136 = vadd.xlane.f32.xlu0 %v133
    %v137 = vpop.xlane.xlu0 %136
    %v138 = vlog2.pop %v135
    %v139 = vmul.f32 %v138, 0.6931472
    %v140 = vlog2.pop %v137
    %v141 = vmul.f32 %v140, 0.6931472
    %142 = vset.pattern.permute.xlu0 0
    %143 = vperm.xlu0 %142, %v117
    %v144 = vpop.permute.xlu0 %143
    %145 = vset.pattern.permute.xlu0 0
    %146 = vperm.xlu0 %145, %v118
    %v147 = vpop.permute.xlu0 %146
    %vm148 = vcmp.eq.s32.totalorder %v120, %v144
    %vm149 = vcmp.eq.s32.totalorder %v120, %v147
    %v150 = vsel %vm148, 1, 0
    %v151 = vsel %vm149, 1, 0
    %v152 = vcvt.s32.f32 %v150
    %v153 = vcvt.s32.f32 %v151
    %v154 = vmul.f32 %v122, %v152
    %v155 = vmul.f32 %v123, %v153
    %156 = vadd.xlane.f32.xlu0 %v154
    %v157 = vpop.xlane.xlu0 %156
    %158 = vadd.xlane.f32.xlu0 %v155
    %v159 = vpop.xlane.xlu0 %158
    %v160 = vadd.f32 %v125, %v139
    %v161 = vadd.f32 %v127, %v141
    %v162 = vsub.f32 %v160, %v157
    %v163 = vsub.f32 %v161, %v159
    %vm164 = vcmp.ne.s32.totalorder %v117, 4294967295
    %vm165 = vcmp.ne.s32.totalorder %v118, 4294967295
    %v166 = vsel %vm164, %v162, 0.0
    %v167 = vsel %vm165, %v163, 0.0
    %vm168 = vcmask 7168
    %v169 = vsel %vm168, %v166, 0.0
    %v170 = vsel %vm168, %v167, 0.0
    %v171 = vadd.f32 %v169, %v170
    %172 = vadd.xlane.f32.xlu0 %v171
    %v173 = vpop.xlane.xlu0 %172
    %v174 = vrot.slane %v173, 4
    %v175 = vadd.f32 %v173, %v174
    %v176 = vrot.slane %v175, 2
    %v177 = vadd.f32 %v175, %v176
    %v178 = vrot.slane %v177, 1
    %v179 = vadd.f32 %v177, %v178
    %s180 = vtos %v179
    %v181 = vsel %vm164, 1, 0
    %v182 = vsel %vm165, 1, 0
    %v183 = vcvt.s32.f32 %v181
    %v184 = vcvt.s32.f32 %v182
    %v185 = vsel %vm168, %v183, 0.0
    %v186 = vsel %vm168, %v184, 0.0
    %v187 = vadd.f32 %v185, %v186
    %188 = vadd.xlane.f32.xlu0 %v187
    %v189 = vpop.xlane.xlu0 %188
    %v190 = vrot.slane %v189, 4
    %v191 = vadd.f32 %v189, %v190
    %v192 = vrot.slane %v191, 2
    %v193 = vadd.f32 %v191, %v192
    %v194 = vrot.slane %v193, 1
    %v195 = vadd.f32 %v193, %v194
    %s196 = vtos %v195
    %vm197 = vcmp.eq.s32.totalorder %v120, 0
    %vm198 = vcmp.eq.s32.totalorder %v120, 1
    %v199 = vstv %s196
    %v200 = vsel %vm198, %v199, 0.0
    %v201 = vstv %s180
    %v202 = vsel %vm197, %v201, %v200
    %203 = vst [vmem:[#allocation6] sm:$0x1] %v202
    // Predicated region
    $region22: #{tpu_custom_call.1} parent=1 // pred_check
      _
    $region23: #{tpu_custom_call.1} parent=1 // pred_check_branch
      %205 = sbr.rel (0) target = $region25
    $region24: #{tpu_custom_call.1} parent=1 // pred_region
      %s207 = ssub.s32 128, 128
      %208 = vsyncadd [#allocation4], %s207
      %s209 = sshll.u32 [#allocation5], 4
      %s210 = int_to_ptr.vmem [resolvable:$true] %s209
      %215 = dma.vmem_to_hbm [thread:$0]  %s210, 128, %s4, [#allocation4], 64, 64, 4
    $region25: #{tpu_custom_call.1} parent=1 // pred_fallthru
      _
    // Predicated region
    $region26: #{tpu_custom_call.1} parent=1 // pred_check
      _
    $region27: #{tpu_custom_call.1} parent=1 // pred_check_branch
      %217 = sbr.rel (0) target = $region29
    $region28: #{tpu_custom_call.1} parent=1 // pred_region
      %s219 = ssub.s32 16, 16
      %220 = vsyncadd [#allocation7], %s219
      %s222 = sshll.u32 [#allocation6], 4
      %s223 = int_to_ptr.vmem [resolvable:$true] %s222
      %225 = dma.vmem_to_hbm [thread:$0]  %s223, 16, %s5, [#allocation7]
    $region29: #{tpu_custom_call.1} parent=1 // pred_fallthru
      _
    // Predicated region
    $region30: #{tpu_custom_call.1} parent=1 // pred_check
      _
    $region31: #{tpu_custom_call.1} parent=1 // pred_check_branch
      %227 = sbr.rel (0) target = $region33
    $region32: #{tpu_custom_call.1} parent=1 // pred_region
      %228 = dma.done [#allocation4], 128
    $region33: #{tpu_custom_call.1} parent=1 // pred_fallthru
      _
    // Predicated region
    $region34: #{tpu_custom_call.1} parent=1 // pred_check
      _
    $region35: #{tpu_custom_call.1} parent=1 // pred_check_branch
      %230 = sbr.rel (0) target = $region37
    $region36: #{tpu_custom_call.1} parent=1 // pred_region
      %231 = dma.done [#allocation7], 16
    $region37: #{tpu_custom_call.1} parent=1 // pred_fallthru
      _
    %232 = vsyncpa [#allocation3], 1
    %233 = vsyncpa [#allocation4], 1
    %234 = vsyncpa [#allocation7], 1

</llo_original>
